<compile_context>
chip_gen: v7x
topology: tpu7x:2x2x1
jax: 0.10.0
libtpu: 0.0.40
codegen_flags: <defaults>
</compile_context>

<pallas_src>
import functools

import jax
import jax.numpy as jnp
from jax.experimental import pallas as pl
from jax.experimental.pallas import tpu as pltpu

LANE = 128     # lane width (last-dim tiling)
SUBLANE = 8    # f32 sublane width (second-to-last-dim tiling)


def _round_up(n, m):
    return ((n + m - 1) // m) * m


def _round_down(n, m):
    return (n // m) * m


def _device_vmem_bytes():
    """Physical VMEM of the attached TPU, with a conservative fallback."""
    try:
        return int(pltpu.get_tpu_info().vmem_capacity_bytes)
    except Exception:
        return 64 << 20   # smallest current part (v7x per-TC) as safe fallback


def prepare_params(w1, b1, w2, b2, *, compute_dtype=jnp.bfloat16):
    """One-time parameter preprocessing (hoisted out of the per-call path).

    * H and O are zero-padded up to multiples of 128: both MXU passes become
      lane-dense and the final store is an unmasked full-lane vst.
    * Weights are cast to bf16 (MXU-native); biases stay f32 and are added to
      the f32 accumulators inside the kernel.
    Layouts are (in, out) == transpose of torch nn.Linear's (out, in).
    """
    K, H = w1.shape
    O = w2.shape[1]
    H_pad = max(LANE, _round_up(H, LANE))
    O_pad = max(LANE, _round_up(O, LANE))

    w1p = jnp.pad(w1, ((0, 0), (0, H_pad - H))).astype(compute_dtype)
    b1p = jnp.pad(jnp.reshape(b1, (1, H)), ((0, 0), (0, H_pad - H))).astype(jnp.float32)
    w2p = jnp.pad(w2, ((0, H_pad - H), (0, O_pad - O))).astype(compute_dtype)
    b2p = jnp.pad(jnp.reshape(b2, (1, O)), ((0, 0), (0, O_pad - O))).astype(jnp.float32)
    return (w1p, b1p, w2p, b2p)


def mlp_kernel(x_ref, w1_ref, b1_ref, w2_ref, b2_ref, o_ref):
    # Hoisted bias reads (single broadcast each).
    b1 = b1_ref[...]                                    # (1, H_pad) f32
    b2 = b2_ref[...]                                    # (1, O_pad) f32
    # Layer 1: bf16 MXU matmul with f32 accumulation, bias + ReLU on the VPU.
    x = x_ref[...].astype(w1_ref.dtype)                 # (TB, K) bf16
    h = jnp.dot(x, w1_ref[...],
                preferred_element_type=jnp.float32)     # (TB, H_pad) f32
    h = jnp.maximum(h + b1, 0.0)
    # Layer 2: bf16 MXU matmul with f32 accumulation; single lane-dense store.
    out = jnp.dot(h.astype(w2_ref.dtype), w2_ref[...],
                  preferred_element_type=jnp.float32)   # (TB, O_pad) f32
    o_ref[...] = (out + b2).astype(o_ref.dtype)


@functools.partial(jax.jit,
                   static_argnames=("out_features", "batch_tile", "x_buffers"))
def net_forward(x, params, *, out_features, batch_tile=512, x_buffers=2):
    """Pallas forward pass of Net.

    x       : (B, input_size) f32
    params  : (w1p, b1p, w2p, b2p) from prepare_params (padded, bf16 weights)
    returns : (B, out_features) in x.dtype
    """
    w1p, b1p, w2p, b2p = params
    B, K = x.shape
    H_pad = w1p.shape[1]
    O_pad = w2p.shape[1]
    x_item = jnp.dtype(x.dtype).itemsize
    w_item = jnp.dtype(w1p.dtype).itemsize

    # --- Batch tile selection ------------------------------------------------
    if B <= SUBLANE:
        TB = B                                    # block == full (tiny) batch
    else:
        TB = _round_up(min(batch_tile, B), SUBLANE)
        # v7x megacore: give the "parallel" batch axis >= 2 grid steps so both
        # TensorCores get work (neutral on single-TC v5e/v6e).
        TB = min(TB, _round_up(pl.cdiv(B, 2), SUBLANE))
        # Couple TB to H: keep the f32 intermediate h = (TB, H_pad) to ~4 MiB.
        max_tb_for_h = max(SUBLANE, _round_down((4 << 20) // (H_pad * 4), SUBLANE))
        TB = max(SUBLANE, min(TB, max_tb_for_h))

    # --- VMEM fit check / auto-retile (64 MiB v7x vs 128 MiB v5e/v6e) --------
    vmem_phys = _device_vmem_bytes()
    budget = max(16 << 20, vmem_phys - (8 << 20))   # leave ~8 MiB headroom

    def _need(tb):
        resident = (K * H_pad + H_pad * O_pad) * w_item + (H_pad + O_pad) * 4
        tiles = x_buffers * tb * K * x_item + 2 * tb * O_pad * x_item
        interm = tb * H_pad * 4
        return resident + tiles + interm

    need = _need(TB)
    while need > 0.75 * budget and TB > SUBLANE:
        TB = max(SUBLANE, _round_up(TB // 2, SUBLANE))
        need = _need(TB)
    # TODO(synk): if resident bf16 weights alone exceed the budget, add a K/H
    # grid axis with a VMEM accumulator (init/finalize via pl.when).

    vmem_limit = int(min(budget, max(32 << 20, need + (4 << 20))))

    grid = (pl.cdiv(B, TB),)

    cost = pl.CostEstimate(
        flops=2 * B * (K * H_pad + H_pad * O_pad),
        transcendentals=0,
        bytes_accessed=(B * K * x_item
                        + (K * H_pad + H_pad * O_pad) * w_item
                        + (H_pad + O_pad) * 4
                        + B * O_pad * x_item),
    )

    x_spec_kwargs = {}
    if x_buffers != 2:   # only override the default 2-deep pipeline if asked
        x_spec_kwargs["pipeline_mode"] = pl.Buffered(x_buffers)

    out = pl.pallas_call(
        mlp_kernel,
        out_shape=jax.ShapeDtypeStruct((B, O_pad), x.dtype),
        grid_spec=pl.GridSpec(
            grid=grid,
            in_specs=[
                # Batch-tiled input: new tile per grid step (pipelined DMA);
                # ragged last tile handled by Pallas masking.
                pl.BlockSpec((TB, K), lambda i: (i, 0), **x_spec_kwargs),
                # Weights / biases: constant index_map -> DMA'd once, VMEM-resident.
                pl.BlockSpec((K, H_pad), lambda i: (0, 0)),
                pl.BlockSpec((1, H_pad), lambda i: (0, 0)),
                pl.BlockSpec((H_pad, O_pad), lambda i: (0, 0)),
                pl.BlockSpec((1, O_pad), lambda i: (0, 0)),
            ],
            out_specs=pl.BlockSpec((TB, O_pad), lambda i: (i, 0)),
        ),
        compiler_params=pltpu.CompilerParams(
            dimension_semantics=("parallel",),   # batch axis: shard across TCs on v7x
            vmem_limit_bytes=vmem_limit,
        ),
        cost_estimate=cost,
    )(x, w1p, b1p, w2p, b2p)

    # Strip only the lane padding of the output dim (O_pad is required for
    # unmasked lane-dense stores); no batch pad/slice copies anymore.
    if O_pad != out_features:
        out = out[:, :out_features]
    return out


def init_params(key, input_size, hidden_size, output_size, dtype=jnp.float32):
    """Deterministic init mirroring torch.nn.Linear (uniform +/- 1/sqrt(fan_in))."""
    k1, k2, k3, k4 = jax.random.split(key, 4)
    bound1 = 1.0 / (input_size ** 0.5)
    bound2 = 1.0 / (hidden_size ** 0.5)
    # Stored as (in, out) == transpose of torch's (out, in) weight layout.
    w1 = jax.random.uniform(k1, (input_size, hidden_size), dtype,
                            minval=-bound1, maxval=bound1)
    b1 = jax.random.uniform(k2, (1, hidden_size), dtype,
                            minval=-bound1, maxval=bound1)
    w2 = jax.random.uniform(k3, (hidden_size, output_size), dtype,
                            minval=-bound2, maxval=bound2)
    b2 = jax.random.uniform(k4, (1, output_size), dtype,
                            minval=-bound2, maxval=bound2)
    return w1, b1, w2, b2


if __name__ == "__main__":
    # Small shapes consistent with the MLP forward.
    batch, input_size, hidden_size, output_size = 8, 32, 64, 16

    key = jax.random.PRNGKey(0)
    kx, kp = jax.random.split(key)
    x = jax.random.normal(kx, (batch, input_size), jnp.float32)
    w1, b1, w2, b2 = init_params(kp, input_size, hidden_size, output_size)

    # One-time preprocessing: lane padding + bf16 weight cast (out of call path).
    params = prepare_params(w1, b1, w2, b2)

    out = net_forward(x, params, out_features=output_size)
    jax.block_until_ready(out)

    # Reference 1: same numerical path (bf16 operands, f32 accumulation).
    w1p, b1p, w2p, b2p = params
    h_ref = jnp.maximum(
        jnp.dot(x.astype(jnp.bfloat16), w1p,
                preferred_element_type=jnp.float32) + b1p, 0.0)
    ref_bf16 = (jnp.dot(h_ref.astype(jnp.bfloat16), w2p,
                        preferred_element_type=jnp.float32) + b2p)[:, :output_size]
    # Reference 2: full-f32 math of the original module (looser tolerance,
    # accounts for bf16 operand rounding).
    ref_f32 = jnp.maximum(x @ w1 + b1, 0.0) @ w2 + b2

    assert out.shape == (batch, output_size)
    assert jnp.allclose(out, ref_bf16, atol=5e-3, rtol=5e-3)
    assert jnp.allclose(out, ref_f32, atol=5e-2, rtol=5e-2)

    print("KERNEL_OK")
</pallas_src>

<mosaic_0001>
module attributes {stable_mosaic.version = 11 : i64} {
  func.func @mlp_kernel(%arg0: i32, %arg1: memref<8x32xf32, #tpu.memory_space<vmem>>, %arg2: memref<32x128xbf16, #tpu.memory_space<vmem>>, %arg3: memref<1x128xf32, #tpu.memory_space<vmem>>, %arg4: memref<128x128xbf16, #tpu.memory_space<vmem>>, %arg5: memref<1x128xf32, #tpu.memory_space<vmem>>, %arg6: memref<8x128xf32, #tpu.memory_space<vmem>>) attributes {dimension_semantics = [#tpu.dimension_semantics<parallel>], iteration_bounds = array<i64: 1>, scalar_prefetch = 0 : i64, scratch_operands = 0 : i64, tpu.core_type = #tpu.core_type<tc>, window_params = [{transform_indices = @transform_0, window_bounds = array<i64: 8, 32>}, {pipeline_mode = #tpu.pipeline_mode<synchronous>, transform_indices = @transform_1, window_bounds = array<i64: 32, 128>}, {pipeline_mode = #tpu.pipeline_mode<synchronous>, transform_indices = @transform_2, window_bounds = array<i64: 1, 128>}, {pipeline_mode = #tpu.pipeline_mode<synchronous>, transform_indices = @transform_3, window_bounds = array<i64: 128, 128>}, {pipeline_mode = #tpu.pipeline_mode<synchronous>, transform_indices = @transform_4, window_bounds = array<i64: 1, 128>}, {transform_indices = @transform_5, window_bounds = array<i64: 8, 128>}]} {
    %c0 = arith.constant 0 : index
    %c0_0 = arith.constant 0 : index
    %0 = vector.load %arg3[%c0, %c0_0] : memref<1x128xf32, #tpu.memory_space<vmem>>, vector<1x128xf32>
    %c0_1 = arith.constant 0 : index
    %c0_2 = arith.constant 0 : index
    %1 = vector.load %arg5[%c0_1, %c0_2] : memref<1x128xf32, #tpu.memory_space<vmem>>, vector<1x128xf32>
    %c0_3 = arith.constant 0 : index
    %c0_4 = arith.constant 0 : index
    %2 = vector.load %arg1[%c0_3, %c0_4] : memref<8x32xf32, #tpu.memory_space<vmem>>, vector<8x32xf32>
    %3 = arith.truncf %2 : vector<8x32xf32> to vector<8x32xbf16>
    %c0_5 = arith.constant 0 : index
    %c0_6 = arith.constant 0 : index
    %4 = vector.load %arg2[%c0_5, %c0_6] : memref<32x128xbf16, #tpu.memory_space<vmem>>, vector<32x128xbf16>
    %cst = arith.constant dense<0.000000e+00> : vector<8x128xf32>
    %5 = tpu.matmul %3, %4, %cst {dimension_numbers = #tpu.dot_dimension_numbers<[1], [0], [0], [1], [0, 0, 1, 1], [], []>} : vector<8x32xbf16>, vector<32x128xbf16>, vector<8x128xf32> -> vector<8x128xf32>
    %6 = vector.broadcast %0 : vector<1x128xf32> to vector<8x128xf32>
    %7 = arith.addf %5, %6 : vector<8x128xf32>
    %cst_7 = arith.constant 0.000000e+00 : f32
    %8 = vector.broadcast %cst_7 : f32 to vector<8x128xf32>
    %9 = arith.maximumf %7, %8 : vector<8x128xf32>
    %10 = arith.truncf %9 : vector<8x128xf32> to vector<8x128xbf16>
    %c0_8 = arith.constant 0 : index
    %c0_9 = arith.constant 0 : index
    %11 = vector.load %arg4[%c0_8, %c0_9] : memref<128x128xbf16, #tpu.memory_space<vmem>>, vector<128x128xbf16>
    %cst_10 = arith.constant dense<0.000000e+00> : vector<8x128xf32>
    %12 = tpu.matmul %10, %11, %cst_10 {dimension_numbers = #tpu.dot_dimension_numbers<[1], [0], [0], [1], [0, 0, 1, 1], [], []>} : vector<8x128xbf16>, vector<128x128xbf16>, vector<8x128xf32> -> vector<8x128xf32>
    %13 = vector.broadcast %1 : vector<1x128xf32> to vector<8x128xf32>
    %14 = arith.addf %12, %13 : vector<8x128xf32>
    %c0_11 = arith.constant 0 : index
    %c0_12 = arith.constant 0 : index
    %15 = vector.load %arg6[%c0_11, %c0_12] : memref<8x128xf32, #tpu.memory_space<vmem>>, vector<8x128xf32>
    tpu.vector_store %arg6[%c0_11, %c0_12], %14 {strides = array<i32>} : memref<8x128xf32, #tpu.memory_space<vmem>>, vector<8x128xf32>,
    return
  }
  func.func @transform_0(%arg0: i32) -> (i32, i32) {
    %c0_i32 = arith.constant 0 : i32
    %c0_i32_0 = arith.constant 0 : i32
    return %arg0, %c0_i32 : i32, i32
  }
  func.func @transform_1(%arg0: i32) -> (i32, i32) {
    %c0_i32 = arith.constant 0 : i32
    %c0_i32_0 = arith.constant 0 : i32
    %c0_i32_1 = arith.constant 0 : i32
    return %c0_i32, %c0_i32_0 : i32, i32
  }
  func.func @transform_2(%arg0: i32) -> (i32, i32) {
    %c0_i32 = arith.constant 0 : i32
    %c0_i32_0 = arith.constant 0 : i32
    %c0_i32_1 = arith.constant 0 : i32
    return %c0_i32, %c0_i32_0 : i32, i32
  }
  func.func @transform_3(%arg0: i32) -> (i32, i32) {
    %c0_i32 = arith.constant 0 : i32
    %c0_i32_0 = arith.constant 0 : i32
    %c0_i32_1 = arith.constant 0 : i32
    return %c0_i32, %c0_i32_0 : i32, i32
  }
  func.func @transform_4(%arg0: i32) -> (i32, i32) {
    %c0_i32 = arith.constant 0 : i32
    %c0_i32_0 = arith.constant 0 : i32
    %c0_i32_1 = arith.constant 0 : i32
    return %c0_i32, %c0_i32_0 : i32, i32
  }
  func.func @transform_5(%arg0: i32) -> (i32, i32) {
    %c0_i32 = arith.constant 0 : i32
    %c0_i32_0 = arith.constant 0 : i32
    return %arg0, %c0_i32 : i32, i32
  }
}

</mosaic_0001>

<llo_original>
// kernel: net_forward.1
$region0: #{net_forward.1}
  #allocation0 [shape = 'u32[]', space=smem, size = 0x4, offset = 0x4, fixed_abs, tag = 'smem constant byte address 0x4 - core index']
  #allocation1 [shape = 'u32[144,128]{1,0:T(1,128)}', space=vmem, size = 0x12000, scoped, tag = 'internal scratch']
  %s0 = inlined_call_operand.hbm [shape: f32[8,32], index: 0, kind: input, shape index: {}]
  %s1 = inlined_call_operand.hbm [shape: bf16[32,128], index: 1, kind: input, shape index: {}]
  %s2 = inlined_call_operand.vmem [shape: f32[1,128], index: 2, kind: input, shape index: {}]
  %s3 = inlined_call_operand.hbm [shape: bf16[128,128], index: 3, kind: input, shape index: {}]
  %s4 = inlined_call_operand.vmem [shape: f32[1,128], index: 4, kind: input, shape index: {}]
  %s5 = inlined_call_operand.hbm [shape: f32[8,128], index: 5, kind: output, shape index: {}]
  %s6 = sld [smem:[#allocation0]]
  $region42: #{net_forward.1} parent=0
    _
  %s8 = ssub.s32 1, %s6
  %s9 = scalar_select 0, %s8, %s6
  $region1: #{net_forward.1} parent=0
    #allocation2 [shape = 'u8[4096]{0}', space=vmem, size = 0x1000, scoped, tag = 'input window, operand 0, single buffered']
    #allocation3 [shape = 's32[1]{0}', space=sflag, size = 0x4, scoped, tag = 'scoped memory for net_forward.1']
    #allocation4 [shape = 's32[1]{0}', space=sflag, size = 0x4, scoped, tag = 'scoped memory for net_forward.1']
    #allocation5 [shape = 'u8[8192]{0}', space=vmem, size = 0x2000, scoped, tag = 'input window, operand 1, single buffered']
    #allocation6 [shape = 's32[1]{0}', space=sflag, size = 0x4, scoped, tag = 'scoped memory for net_forward.1']
    #allocation7 [shape = 'u8[32768]{0}', space=vmem, size = 0x8000, scoped, tag = 'input window, operand 3, single buffered']
    #allocation8 [shape = 'u8[4096]{0}', space=vmem, size = 0x1000, scoped, tag = 'output window, operand 0, single buffered']
    %10 = vsyncpa [#allocation3], 0
    %11 = vsyncpa [#allocation6], 0
    %12 = vsyncpa [#allocation4], 0
    // Predicated region
    $region2: #{net_forward.1} parent=1 // pred_check
      _
    $region3: #{net_forward.1} parent=1 // pred_check_branch
      %14 = sbr.rel (0) target = $region5
    $region4: #{net_forward.1} parent=1 // pred_region
      %s16 = ssub.s32 128, 128
      %17 = vsyncadd [#allocation3], %s16
      %s19 = sshll.u32 [#allocation2], 4
      %s20 = int_to_ptr.vmem [resolvable:$true] %s19
      %22 = dma.hbm_to_vmem [thread:$0]  %s0, 128, %s20, [#allocation3]
    $region5: #{net_forward.1} parent=1 // pred_fallthru
      _
    // Predicated region
    $region6: #{net_forward.1} parent=1 // pred_check
      _
    $region7: #{net_forward.1} parent=1 // pred_check_branch
      %24 = sbr.rel (0) target = $region9
    $region8: #{net_forward.1} parent=1 // pred_region
      %s26 = ssub.s32 256, 256
      %27 = vsyncadd [#allocation6], %s26
      %s28 = sshll.u32 [#allocation5], 4
      %s29 = int_to_ptr.vmem [resolvable:$true] %s28
      %34 = dma.hbm_to_vmem [thread:$0]  %s1, 256, %s29, [#allocation6], 64, 64, 4
    $region9: #{net_forward.1} parent=1 // pred_fallthru
      _
    // Predicated region
    $region10: #{net_forward.1} parent=1 // pred_check
      _
    $region11: #{net_forward.1} parent=1 // pred_check_branch
      %36 = sbr.rel (0) target = $region13
    $region12: #{net_forward.1} parent=1 // pred_region
      _
    $region13: #{net_forward.1} parent=1 // pred_fallthru
      _
    // Predicated region
    $region14: #{net_forward.1} parent=1 // pred_check
      _
    $region15: #{net_forward.1} parent=1 // pred_check_branch
      %38 = sbr.rel (0) target = $region17
    $region16: #{net_forward.1} parent=1 // pred_region
      %s40 = ssub.s32 1024, 1024
      %41 = vsyncadd [#allocation6], %s40
      %s42 = sshll.u32 [#allocation7], 4
      %s43 = int_to_ptr.vmem [resolvable:$true] %s42
      %48 = dma.hbm_to_vmem [thread:$0]  %s3, 1024, %s43, [#allocation6], 64, 64, 4
    $region17: #{net_forward.1} parent=1 // pred_fallthru
      _
    // Predicated region
    $region18: #{net_forward.1} parent=1 // pred_check
      _
    $region19: #{net_forward.1} parent=1 // pred_check_branch
      %50 = sbr.rel (0) target = $region21
    $region20: #{net_forward.1} parent=1 // pred_region
      _
    $region21: #{net_forward.1} parent=1 // pred_fallthru
      _
    // Predicated region
    $region22: #{net_forward.1} parent=1 // pred_check
      _
    $region23: #{net_forward.1} parent=1 // pred_check_branch
      %52 = sbr.rel (0) target = $region25
    $region24: #{net_forward.1} parent=1 // pred_region
      %53 = dma.done [#allocation3], 128
    $region25: #{net_forward.1} parent=1 // pred_fallthru
      _
    // Predicated region
    $region26: #{net_forward.1} parent=1 // pred_check
      _
    $region27: #{net_forward.1} parent=1 // pred_check_branch
      %55 = sbr.rel (0) target = $region29
    $region28: #{net_forward.1} parent=1 // pred_region
      %56 = dma.done [#allocation6], 256
    $region29: #{net_forward.1} parent=1 // pred_fallthru
      _
    // Predicated region
    $region30: #{net_forward.1} parent=1 // pred_check
      _
    $region31: #{net_forward.1} parent=1 // pred_check_branch
      %58 = sbr.rel (0) target = $region33
    $region32: #{net_forward.1} parent=1 // pred_region
      %59 = dma.done [#allocation6], 1024
    $region33: #{net_forward.1} parent=1 // pred_fallthru
      _
    %v61 = vld [vmem:[%s2] sm:$0x1]
    %v62 = vld [vmem:[%s4] sm:$0x1]
    %v63 = vld [vmem:[#allocation2] sm:$0xff]
    %v64 = vpack.c.bf16 %v63, %v63
    %v65 = vld [vmem:[#allocation5] sm:$0xf]
    %v66 = vld [vmem:[#allocation5 + $0x4] sm:$0xf]
    %v67 = vld [vmem:[#allocation5 + $0x8] sm:$0xf]
    %v68 = vld [vmem:[#allocation5 + $0xc] sm:$0xf]
    %v70 = vlaneseq
    %v71 = vshrl.u32 %v70, 7
    %v72 = vsub.s32 0, %v71
    %v73 = vrot.slane %v61, %v72
    %v79 = vunpack.c.l.b16 %v65
    %v80 = vunpack.c.l.b16 %v66
    %v81 = vunpack.c.l.b16 %v67
    %v82 = vunpack.c.l.b16 %v68
    %v83 = vpack.c.b16 %v80, %v79
    %v84 = vpack.c.b16 %v82, %v81
    %vm87 = vcmask 261120
    %v89 = vsel %vm87, %v64, 0
    %91 = vmatprep.subr.bf16.mxu0 0
    %92 = vmatpush1.bf16.msra.mxu0 %v83
    %93 = vmatprep.subr.bf16.mxu0 0
    %94 = vmatpush1.bf16.msra.mxu0 %v84
    %95 = vmatprep.subr.bf16.mxu0 0
    %96 = vmatpush1.bf16.msra.mxu0 0
    %97 = vmatprep.subr.bf16.mxu0 0
    %98 = vmatpush1.bf16.msra.mxu0 0
    %99 = vmatprep.subr.bf16.mxu0 0
    %100 = vmatpush1.bf16.msra.mxu0 0
    %101 = vmatprep.subr.bf16.mxu0 0
    %102 = vmatpush1.bf16.msra.mxu0 0
    %103 = vmatprep.subr.bf16.mxu0 0
    %104 = vmatpush1.bf16.msra.mxu0 0
    %105 = vmatprep.subr.bf16.mxu0 0
    %106 = vmatpush1.bf16.msra.mxu0 0
    %107 = vmatprep.subr.bf16.mxu0 0
    %108 = vmatpush1.bf16.msra.mxu0 0
    %109 = vmatprep.subr.bf16.mxu0 0
    %110 = vmatpush1.bf16.msra.mxu0 0
    %111 = vmatprep.subr.bf16.mxu0 0
    %112 = vmatpush1.bf16.msra.mxu0 0
    %113 = vmatprep.subr.bf16.mxu0 0
    %114 = vmatpush1.bf16.msra.mxu0 0
    %115 = vmatprep.subr.bf16.mxu0 0
    %116 = vmatpush1.bf16.msra.mxu0 0
    %117 = vmatprep.subr.bf16.mxu0 0
    %118 = vmatpush1.bf16.msra.mxu0 0
    %119 = vmatprep.subr.bf16.mxu0 0
    %120 = vmatpush1.bf16.msra.mxu0 0
    %121 = vmatprep.subr.bf16.mxu0 0
    %122 = vmatpush1.bf16.msra.mxu0 0
    %123 = vmatprep.mubr.bf16.mxu0 0
    %124 = vmatmul.mubr.bf16.gmra.mrb[0].mxu0 %v89
    %v125 = vpop.f32.mrb[0].mxu0
    %v126 = vadd.f32 %v73, %v125
    %v127 = vpop.f32.mrb[0].mxu0
    %v128 = vpop.f32.mrb[0].mxu0
    %v129 = vpop.f32.mrb[0].mxu0
    %130 = vdwg.mxu0
    %v131 = vmax.f32 %v126, 0.0
    %v132 = vpack.c.bf16 %v131, %v131
    %v133 = vld [vmem:[#allocation7] sm:$0xf]
    %v134 = vld [vmem:[#allocation7 + $0x4] sm:$0xf]
    %v135 = vld [vmem:[#allocation7 + $0x8] sm:$0xf]
    %v136 = vld [vmem:[#allocation7 + $0xc] sm:$0xf]
    %v137 = vld [vmem:[#allocation7 + $0x10] sm:$0xf]
    %v138 = vld [vmem:[#allocation7 + $0x14] sm:$0xf]
    %v139 = vld [vmem:[#allocation7 + $0x18] sm:$0xf]
    %v140 = vld [vmem:[#allocation7 + $0x1c] sm:$0xf]
    %v141 = vld [vmem:[#allocation7 + $0x20] sm:$0xf]
    %v142 = vld [vmem:[#allocation7 + $0x24] sm:$0xf]
    %v143 = vld [vmem:[#allocation7 + $0x28] sm:$0xf]
    %v144 = vld [vmem:[#allocation7 + $0x2c] sm:$0xf]
    %v145 = vld [vmem:[#allocation7 + $0x30] sm:$0xf]
    %v146 = vld [vmem:[#allocation7 + $0x34] sm:$0xf]
    %v147 = vld [vmem:[#allocation7 + $0x38] sm:$0xf]
    %v148 = vld [vmem:[#allocation7 + $0x3c] sm:$0xf]
    %v150 = vlaneseq
    %v151 = vshrl.u32 %v150, 7
    %v152 = vsub.s32 0, %v151
    %v153 = vrot.slane %v62, %v152
    %v171 = vunpack.c.l.b16 %v133
    %v172 = vunpack.c.l.b16 %v134
    %v173 = vunpack.c.l.b16 %v135
    %v174 = vunpack.c.l.b16 %v136
    %v175 = vunpack.c.l.b16 %v137
    %v176 = vunpack.c.l.b16 %v138
    %v177 = vunpack.c.l.b16 %v139
    %v178 = vunpack.c.l.b16 %v140
    %v179 = vunpack.c.l.b16 %v141
    %v180 = vunpack.c.l.b16 %v142
    %v181 = vunpack.c.l.b16 %v143
    %v182 = vunpack.c.l.b16 %v144
    %v183 = vunpack.c.l.b16 %v145
    %v184 = vunpack.c.l.b16 %v146
    %v185 = vunpack.c.l.b16 %v147
    %v186 = vunpack.c.l.b16 %v148
    %v187 = vpack.c.b16 %v172, %v171
    %v188 = vpack.c.b16 %v174, %v173
    %v189 = vpack.c.b16 %v176, %v175
    %v190 = vpack.c.b16 %v178, %v177
    %v191 = vpack.c.b16 %v180, %v179
    %v192 = vpack.c.b16 %v182, %v181
    %v193 = vpack.c.b16 %v184, %v183
    %v194 = vpack.c.b16 %v186, %v185
    %203 = vmatprep.subr.bf16.mxu0 0
    %204 = vmatpush1.bf16.msra.mxu0 %v187
    %205 = vmatprep.subr.bf16.mxu0 0
    %206 = vmatpush1.bf16.msra.mxu0 %v188
    %207 = vmatprep.subr.bf16.mxu0 0
    %208 = vmatpush1.bf16.msra.mxu0 %v189
    %209 = vmatprep.subr.bf16.mxu0 0
    %210 = vmatpush1.bf16.msra.mxu0 %v190
    %211 = vmatprep.subr.bf16.mxu0 0
    %212 = vmatpush1.bf16.msra.mxu0 %v191
    %213 = vmatprep.subr.bf16.mxu0 0
    %214 = vmatpush1.bf16.msra.mxu0 %v192
    %215 = vmatprep.subr.bf16.mxu0 0
    %216 = vmatpush1.bf16.msra.mxu0 %v193
    %217 = vmatprep.subr.bf16.mxu0 0
    %218 = vmatpush1.bf16.msra.mxu0 %v194
    %219 = vmatprep.subr.bf16.mxu0 0
    %220 = vmatpush1.bf16.msra.mxu0 0
    %221 = vmatprep.subr.bf16.mxu0 0
    %222 = vmatpush1.bf16.msra.mxu0 0
    %223 = vmatprep.subr.bf16.mxu0 0
    %224 = vmatpush1.bf16.msra.mxu0 0
    %225 = vmatprep.subr.bf16.mxu0 0
    %226 = vmatpush1.bf16.msra.mxu0 0
    %227 = vmatprep.subr.bf16.mxu0 0
    %228 = vmatpush1.bf16.msra.mxu0 0
    %229 = vmatprep.subr.bf16.mxu0 0
    %230 = vmatpush1.bf16.msra.mxu0 0
    %231 = vmatprep.subr.bf16.mxu0 0
    %232 = vmatpush1.bf16.msra.mxu0 0
    %233 = vmatprep.subr.bf16.mxu0 0
    %234 = vmatpush1.bf16.msra.mxu0 0
    %235 = vmatprep.mubr.bf16.mxu0 0
    %236 = vmatmul.mubr.bf16.gmra.mrb[0].mxu0 %v132
    %v237 = vpop.f32.mrb[0].mxu0
    %v238 = vadd.f32 %v153, %v237
    %v239 = vpop.f32.mrb[0].mxu0
    %v240 = vpop.f32.mrb[0].mxu0
    %v241 = vpop.f32.mrb[0].mxu0
    %242 = vdwg.mxu0
    %243 = vst [vmem:[#allocation8] sm:$0xff] %v238
    // Predicated region
    $region34: #{net_forward.1} parent=1 // pred_check
      _
    $region35: #{net_forward.1} parent=1 // pred_check_branch
      %245 = sbr.rel (0) target = $region37
    $region36: #{net_forward.1} parent=1 // pred_region
      %s247 = ssub.s32 128, 128
      %248 = vsyncadd [#allocation4], %s247
      %s250 = sshll.u32 [#allocation8], 4
      %s251 = int_to_ptr.vmem [resolvable:$true] %s250
      %253 = dma.vmem_to_hbm [thread:$0]  %s251, 128, %s5, [#allocation4]
    $region37: #{net_forward.1} parent=1 // pred_fallthru
      _
    // Predicated region
    $region38: #{net_forward.1} parent=1 // pred_check
      _
    $region39: #{net_forward.1} parent=1 // pred_check_branch
      %255 = sbr.rel (0) target = $region41
    $region40: #{net_forward.1} parent=1 // pred_region
      %256 = dma.done [#allocation4], 128
    $region41: #{net_forward.1} parent=1 // pred_fallthru
      _
    %257 = vsyncpa [#allocation3], 1
    %258 = vsyncpa [#allocation6], 1
    %259 = vsyncpa [#allocation4], 1

</llo_original>
